<compile_context>
chip_gen: v7x
topology: tpu7x:2x2x1
jax: 0.10.0
libtpu: 0.0.40
codegen_flags: <defaults>
</compile_context>

<pallas_src>
import itertools

import numpy as np
import jax
import jax.numpy as jnp
from jax.experimental import pallas as pl
from jax.experimental.pallas import tpu as pltpu

BN_EPS = 1e-5


def _round_up(x, m):
    return ((x + m - 1) // m) * m


# ----------------------------------------------------------------------------- kernel
def _td_matmul_bias_relu_kernel(x_ref, w_ref, b_ref, o_ref):
    """One M-tile: (TM, K*C_in) @ (K*C_in, C_out) on the MXU, then bias + ReLU.

    x_ref/w_ref are bf16; accumulation and the epilogue are f32 (v5e-safe).
    """
    y = jnp.dot(x_ref[...], w_ref[...], preferred_element_type=jnp.float32)
    y = y + b_ref[...]                                   # conv bias + folded BN shift
    o_ref[...] = jnp.maximum(y, 0.0).astype(o_ref.dtype)  # ReLU


# ----------------------------------------------------------------------------- glue
def build_kernel_map(coords_np, stride=2, ksize=2):
    """Vectorized MinkowskiEngine-style coordinate map for a stride-2, kernel-2 conv.

    Returns:
      out_coords : (M, 4) int64 output voxel coordinates [b, x, y, z]
      nbr        : (ksize**3, M) int32 index into input voxels, -1 if absent
    """
    coords_np = np.asarray(coords_np, dtype=np.int64)
    b = coords_np[:, :1]
    xyz = coords_np[:, 1:]
    out_base = np.concatenate([b, (xyz // stride) * stride], axis=1)
    out_coords = np.unique(out_base, axis=0)
    M = out_coords.shape[0]

    # Pack [b, x, y, z] into a single int64 key for O(log N) lookups.
    lo = min(int(coords_np.min()), int(out_coords.min()))
    hi = max(int(coords_np.max()), int(out_coords.max()) + ksize - 1)
    span = hi - lo + 1

    def pack(c):
        s = c - lo
        return ((s[:, 0] * span + s[:, 1]) * span + s[:, 2]) * span + s[:, 3]

    in_keys = pack(coords_np)
    order = np.argsort(in_keys, kind="stable")
    sorted_keys = in_keys[order]

    offsets = np.array(list(itertools.product(range(ksize), repeat=3)), dtype=np.int64)
    K = offsets.shape[0]
    nbr = -np.ones((K, M), dtype=np.int32)
    for ki in range(K):
        cand = out_coords.copy()
        cand[:, 1:] += offsets[ki]
        keys = pack(cand)
        pos = np.minimum(np.searchsorted(sorted_keys, keys), sorted_keys.shape[0] - 1)
        hit = sorted_keys[pos] == keys
        nbr[ki, hit] = order[pos[hit]].astype(np.int32)
    return out_coords, nbr


def td_layer_forward(coords, feats, W, bias, gamma, beta, run_mean, run_var,
                     *, tile_m=512):
    """TDLayer forward (default config): sparse conv(k=2,s=2) -> BN(eval) -> ReLU.

    coords: (N,4) int, feats: (N, C_in) f32, W: (K_vol, C_in, C_out) f32.
    Returns (out_coords (M,4) int32, out_feats (M, C_out) f32).
    """
    coords_np = np.asarray(jax.device_get(coords))
    out_coords_np, nbr_np = build_kernel_map(coords_np)

    K, M = nbr_np.shape
    N, C_in = feats.shape
    C_out = W.shape[2]
    KC = K * C_in

    # --- fold eval-mode BatchNorm into the conv weights / bias (host side) ---
    scale = gamma / jnp.sqrt(run_var + BN_EPS)                      # (C_out,)
    W_fold = (W.astype(jnp.float32) * scale[None, None, :]).reshape(KC, C_out)
    b_fold = ((bias - run_mean) * scale + beta).reshape(1, C_out).astype(jnp.float32)

    # --- zero sentinel row replaces the validity-mask multiply ---
    feats_ext = jnp.concatenate(
        [feats.astype(jnp.float32), jnp.zeros((1, C_in), jnp.float32)], axis=0)
    safe = jnp.asarray(np.where(nbr_np >= 0, nbr_np, N).T.astype(np.int32))  # (M, K)
    gathered = feats_ext[safe].reshape(M, KC)                        # (M, K*C_in)

    # --- tile the output-voxel axis (parallel grid axis), pad to the tile size ---
    TM = min(tile_m, _round_up(M, 128))
    M_pad = _round_up(M, TM)
    gathered = jnp.pad(gathered, ((0, M_pad - M), (0, 0)))

    # bf16 matmul inputs; f32 accumulation + epilogue inside the kernel.
    gathered = gathered.astype(jnp.bfloat16)
    W_fold = W_fold.astype(jnp.bfloat16)

    cost = pl.CostEstimate(
        flops=2 * M_pad * KC * C_out,
        transcendentals=0,
        bytes_accessed=gathered.size * 2 + W_fold.size * 2
                       + b_fold.size * 4 + M_pad * C_out * 4)

    out = pl.pallas_call(
        _td_matmul_bias_relu_kernel,
        out_shape=jax.ShapeDtypeStruct((M_pad, C_out), jnp.float32),
        grid_spec=pltpu.PrefetchScalarGridSpec(
            num_scalar_prefetch=0,
            grid=(M_pad // TM,),
            in_specs=[
                pl.BlockSpec((TM, KC), lambda i: (i, 0)),      # gathered feats tile
                pl.BlockSpec((KC, C_out), lambda i: (0, 0)),   # folded weights
                pl.BlockSpec((1, C_out), lambda i: (0, 0)),    # folded bias
            ],
            out_specs=pl.BlockSpec((TM, C_out), lambda i: (i, 0)),
        ),
        compiler_params=pltpu.CompilerParams(
            dimension_semantics=("parallel",)),
        cost_estimate=cost,
    )(gathered, W_fold, b_fold)

    # NOTE: padded tail rows (M..M_pad) contain relu(b_fold) garbage by construction;
    # they are sliced off here and must never be consumed directly.
    return jnp.asarray(out_coords_np.astype(np.int32)), out[:M]


# ----------------------------------------------------------------------------- main
if __name__ == "__main__":
    key = jax.random.PRNGKey(0)

    # module config: TDLayer(input_dim=16, out_dim=32, k=16, kernel_size=2)
    C_in, C_out, KSIZE = 16, 32, 2
    K_VOL = KSIZE ** 3

    # --- synthetic sparse voxel input (B=2 batches, 8^3 grid, 40 voxels per batch) ---
    B, GRID, N_PER_B = 2, 8, 40
    k_coord, k_feat, k_w, k_b, k_bn = jax.random.split(key, 5)

    coords_list = []
    for b in range(B):
        perm = jax.random.permutation(jax.random.fold_in(k_coord, b), GRID ** 3)[:N_PER_B]
        perm = np.asarray(perm)
        xyz = np.stack([perm // (GRID * GRID), (perm // GRID) % GRID, perm % GRID], axis=1)
        bid = np.full((N_PER_B, 1), b, dtype=np.int64)
        coords_list.append(np.concatenate([bid, xyz], axis=1))
    coords = jnp.asarray(np.concatenate(coords_list, axis=0).astype(np.int32))   # (80, 4)
    N = coords.shape[0]

    feats = jax.random.normal(k_feat, (N, C_in), dtype=jnp.float32)

    # --- deterministic parameter init (MinkowskiConvolution kernel: (K_vol, C_in, C_out)) ---
    W = 0.1 * jax.random.normal(k_w, (K_VOL, C_in, C_out), dtype=jnp.float32)
    bias = 0.1 * jax.random.normal(k_b, (C_out,), dtype=jnp.float32)
    gamma = 1.0 + 0.05 * jnp.arange(C_out, dtype=jnp.float32)
    beta = 0.02 * jnp.arange(C_out, dtype=jnp.float32)
    run_mean = 0.01 * jnp.arange(C_out, dtype=jnp.float32)
    run_var = 1.0 + 0.03 * jnp.arange(C_out, dtype=jnp.float32)

    out_coords, out_feats = td_layer_forward(coords, feats, W, bias, gamma, beta,
                                             run_mean, run_var)
    out_feats = jax.block_until_ready(out_feats)

    # --- pure numpy reference (mirrors the bf16 rounding of the matmul inputs) ---
    def bf16_round(a):
        return np.asarray(jnp.asarray(a, jnp.float32).astype(jnp.bfloat16)
                          .astype(jnp.float32))

    coords_np = np.asarray(coords)
    oc_np, nbr_np = build_kernel_map(coords_np)
    K_, M_ = nbr_np.shape
    feats_np = np.asarray(feats)

    scale_np = np.asarray(gamma) / np.sqrt(np.asarray(run_var) + BN_EPS)
    W_fold_np = (np.asarray(W) * scale_np[None, None, :]).reshape(K_ * C_in, C_out)
    b_fold_np = (np.asarray(bias) - np.asarray(run_mean)) * scale_np + np.asarray(beta)

    feats_ext_np = np.concatenate([feats_np, np.zeros((1, C_in), np.float32)], axis=0)
    safe_np = np.where(nbr_np >= 0, nbr_np, feats_np.shape[0]).T                 # (M, K)
    gathered_ref = bf16_round(feats_ext_np[safe_np].reshape(M_, K_ * C_in)).astype(np.float64)
    W_ref = bf16_round(W_fold_np).astype(np.float64)
    ref = np.maximum(gathered_ref @ W_ref + b_fold_np, 0.0)

    np.testing.assert_allclose(np.asarray(out_feats), ref, rtol=1e-4, atol=1e-4)
    assert out_coords.shape[0] == out_feats.shape[0]
    print("KERNEL_OK")
</pallas_src>

<mosaic_0001>
module attributes {stable_mosaic.version = 11 : i64} {
  func.func @_td_matmul_bias_relu_kernel(%arg0: i32, %arg1: memref<128x128xbf16, #tpu.memory_space<vmem>>, %arg2: memref<128x32xbf16, #tpu.memory_space<vmem>>, %arg3: memref<1x32xf32, #tpu.memory_space<vmem>>, %arg4: memref<128x32xf32, #tpu.memory_space<vmem>>) attributes {dimension_semantics = [#tpu.dimension_semantics<parallel>], iteration_bounds = array<i64: 1>, scalar_prefetch = 0 : i64, scratch_operands = 0 : i64, tpu.core_type = #tpu.core_type<tc>, window_params = [{transform_indices = @transform_0, window_bounds = array<i64: 128, 128>}, {pipeline_mode = #tpu.pipeline_mode<synchronous>, transform_indices = @transform_1, window_bounds = array<i64: 128, 32>}, {pipeline_mode = #tpu.pipeline_mode<synchronous>, transform_indices = @transform_2, window_bounds = array<i64: 1, 32>}, {transform_indices = @transform_3, window_bounds = array<i64: 128, 32>}]} {
    %c0 = arith.constant 0 : index
    %c0_0 = arith.constant 0 : index
    %0 = vector.load %arg1[%c0, %c0_0] : memref<128x128xbf16, #tpu.memory_space<vmem>>, vector<128x128xbf16>
    %c0_1 = arith.constant 0 : index
    %c0_2 = arith.constant 0 : index
    %1 = vector.load %arg2[%c0_1, %c0_2] : memref<128x32xbf16, #tpu.memory_space<vmem>>, vector<128x32xbf16>
    %cst = arith.constant dense<0.000000e+00> : vector<128x32xf32>
    %2 = tpu.matmul %0, %1, %cst {dimension_numbers = #tpu.dot_dimension_numbers<[1], [0], [0], [1], [0, 0, 1, 1], [], []>} : vector<128x128xbf16>, vector<128x32xbf16>, vector<128x32xf32> -> vector<128x32xf32>
    %c0_3 = arith.constant 0 : index
    %c0_4 = arith.constant 0 : index
    %3 = vector.load %arg3[%c0_3, %c0_4] : memref<1x32xf32, #tpu.memory_space<vmem>>, vector<1x32xf32>
    %4 = vector.broadcast %3 : vector<1x32xf32> to vector<128x32xf32>
    %5 = arith.addf %2, %4 : vector<128x32xf32>
    %cst_5 = arith.constant 0.000000e+00 : f32
    %6 = vector.broadcast %cst_5 : f32 to vector<128x32xf32>
    %7 = arith.maximumf %5, %6 : vector<128x32xf32>
    %c0_6 = arith.constant 0 : index
    %c0_7 = arith.constant 0 : index
    %8 = vector.load %arg4[%c0_6, %c0_7] : memref<128x32xf32, #tpu.memory_space<vmem>>, vector<128x32xf32>
    tpu.vector_store %arg4[%c0_6, %c0_7], %7 {strides = array<i32>} : memref<128x32xf32, #tpu.memory_space<vmem>>, vector<128x32xf32>,
    return
  }
  func.func @transform_0(%arg0: i32) -> (i32, i32) {
    %c0_i32 = arith.constant 0 : i32
    %c0_i32_0 = arith.constant 0 : i32
    return %arg0, %c0_i32 : i32, i32
  }
  func.func @transform_1(%arg0: i32) -> (i32, i32) {
    %c0_i32 = arith.constant 0 : i32
    %c0_i32_0 = arith.constant 0 : i32
    %c0_i32_1 = arith.constant 0 : i32
    return %c0_i32, %c0_i32_0 : i32, i32
  }
  func.func @transform_2(%arg0: i32) -> (i32, i32) {
    %c0_i32 = arith.constant 0 : i32
    %c0_i32_0 = arith.constant 0 : i32
    %c0_i32_1 = arith.constant 0 : i32
    return %c0_i32, %c0_i32_0 : i32, i32
  }
  func.func @transform_3(%arg0: i32) -> (i32, i32) {
    %c0_i32 = arith.constant 0 : i32
    %c0_i32_0 = arith.constant 0 : i32
    return %arg0, %c0_i32 : i32, i32
  }
}

</mosaic_0001>

<llo_original>
// kernel: tpu_custom_call.1
$region0: #{tpu_custom_call.1}
  #allocation0 [shape = 'u32[]', space=smem, size = 0x4, offset = 0x4, fixed_abs, tag = 'smem constant byte address 0x4 - core index']
  #allocation1 [shape = 'u32[144,128]{1,0:T(1,128)}', space=vmem, size = 0x12000, scoped, tag = 'internal scratch']
  %s0 = inlined_call_operand.vmem [shape: bf16[128,128], index: 0, kind: input, shape index: {}]
  %s1 = inlined_call_operand.vmem [shape: bf16[128,32], index: 1, kind: input, shape index: {}]
  %s2 = inlined_call_operand.vmem [shape: f32[1,32], index: 2, kind: input, shape index: {}]
  %s3 = inlined_call_operand.vmem [shape: f32[128,32], index: 3, kind: output, shape index: {}]
  %s4 = sld [smem:[#allocation0]]
  $region22: #{tpu_custom_call.1} parent=0
    _
  %s6 = ssub.s32 1, %s4
  %s7 = scalar_select 0, %s6, %s4
  // Predicated region
  $region2: #{tpu_custom_call.1} parent=0 // pred_check
    _
  $region3: #{tpu_custom_call.1} parent=0 // pred_check_branch
    %9 = sbr.rel (0) target = $region5
  $region4: #{tpu_custom_call.1} parent=0 // pred_region
    _
  $region5: #{tpu_custom_call.1} parent=0 // pred_fallthru
    _
  // Predicated region
  $region6: #{tpu_custom_call.1} parent=0 // pred_check
    _
  $region7: #{tpu_custom_call.1} parent=0 // pred_check_branch
    %11 = sbr.rel (0) target = $region9
  $region8: #{tpu_custom_call.1} parent=0 // pred_region
    _
  $region9: #{tpu_custom_call.1} parent=0 // pred_fallthru
    _
  // Predicated region
  $region10: #{tpu_custom_call.1} parent=0 // pred_check
    _
  $region11: #{tpu_custom_call.1} parent=0 // pred_check_branch
    %13 = sbr.rel (0) target = $region13
  $region12: #{tpu_custom_call.1} parent=0 // pred_region
    _
  $region13: #{tpu_custom_call.1} parent=0 // pred_fallthru
    _
  %v15 = vld [vmem:[%s0] sm:$0xf]
  %v16 = vld [vmem:[%s0 + $0x4] sm:$0xf]
  %v17 = vld [vmem:[%s0 + $0x8] sm:$0xf]
  %v18 = vld [vmem:[%s0 + $0xc] sm:$0xf]
  %v19 = vld [vmem:[%s0 + $0x10] sm:$0xf]
  %v20 = vld [vmem:[%s0 + $0x14] sm:$0xf]
  %v21 = vld [vmem:[%s0 + $0x18] sm:$0xf]
  %v22 = vld [vmem:[%s0 + $0x1c] sm:$0xf]
  %v23 = vld [vmem:[%s0 + $0x20] sm:$0xf]
  %v24 = vld [vmem:[%s0 + $0x24] sm:$0xf]
  %v25 = vld [vmem:[%s0 + $0x28] sm:$0xf]
  %v26 = vld [vmem:[%s0 + $0x2c] sm:$0xf]
  %v27 = vld [vmem:[%s0 + $0x30] sm:$0xf]
  %v28 = vld [vmem:[%s0 + $0x34] sm:$0xf]
  %v29 = vld [vmem:[%s0 + $0x38] sm:$0xf]
  %v30 = vld [vmem:[%s0 + $0x3c] sm:$0xf]
  %v31 = vld [vmem:[%s1] sm:$0xf]
  %v32 = vld [vmem:[%s1 + $0x4] sm:$0xf]
  %v33 = vld [vmem:[%s1 + $0x8] sm:$0xf]
  %v34 = vld [vmem:[%s1 + $0xc] sm:$0xf]
  %v35 = vld [vmem:[%s1 + $0x10] sm:$0xf]
  %v36 = vld [vmem:[%s1 + $0x14] sm:$0xf]
  %v37 = vld [vmem:[%s1 + $0x18] sm:$0xf]
  %v38 = vld [vmem:[%s1 + $0x1c] sm:$0xf]
  %v39 = vld [vmem:[%s1 + $0x20] sm:$0xf]
  %v40 = vld [vmem:[%s1 + $0x24] sm:$0xf]
  %v41 = vld [vmem:[%s1 + $0x28] sm:$0xf]
  %v42 = vld [vmem:[%s1 + $0x2c] sm:$0xf]
  %v43 = vld [vmem:[%s1 + $0x30] sm:$0xf]
  %v44 = vld [vmem:[%s1 + $0x34] sm:$0xf]
  %v45 = vld [vmem:[%s1 + $0x38] sm:$0xf]
  %v46 = vld [vmem:[%s1 + $0x3c] sm:$0xf]
  %v47 = vld [vmem:[%s2] sm:$0x1]
  %v49 = vlaneseq
  %v50 = vshrl.u32 %v49, 7
  %v51 = vsub.s32 0, %v50
  %v52 = vrot.slane %v47, %v51
  %v70 = vunpack.c.l.b16 %v15
  %v71 = vunpack.c.l.b16 %v16
  %v72 = vunpack.c.l.b16 %v17
  %v73 = vunpack.c.l.b16 %v18
  %v74 = vunpack.c.l.b16 %v19
  %v75 = vunpack.c.l.b16 %v20
  %v76 = vunpack.c.l.b16 %v21
  %v77 = vunpack.c.l.b16 %v22
  %v78 = vunpack.c.l.b16 %v23
  %v79 = vunpack.c.l.b16 %v24
  %v80 = vunpack.c.l.b16 %v25
  %v81 = vunpack.c.l.b16 %v26
  %v82 = vunpack.c.l.b16 %v27
  %v83 = vunpack.c.l.b16 %v28
  %v84 = vunpack.c.l.b16 %v29
  %v85 = vunpack.c.l.b16 %v30
  %v86 = vpack.c.b16 %v71, %v70
  %v87 = vpack.c.b16 %v73, %v72
  %v88 = vpack.c.b16 %v75, %v74
  %v89 = vpack.c.b16 %v77, %v76
  %v90 = vpack.c.b16 %v79, %v78
  %v91 = vpack.c.b16 %v81, %v80
  %v92 = vpack.c.b16 %v83, %v82
  %v93 = vpack.c.b16 %v85, %v84
  %v118 = vunpack.c.l.b16 %v31
  %v119 = vunpack.c.l.b16 %v32
  %v120 = vunpack.c.l.b16 %v33
  %v121 = vunpack.c.l.b16 %v34
  %v122 = vunpack.c.l.b16 %v35
  %v123 = vunpack.c.l.b16 %v36
  %v124 = vunpack.c.l.b16 %v37
  %v125 = vunpack.c.l.b16 %v38
  %v126 = vunpack.c.l.b16 %v39
  %v127 = vunpack.c.l.b16 %v40
  %v128 = vunpack.c.l.b16 %v41
  %v129 = vunpack.c.l.b16 %v42
  %v130 = vunpack.c.l.b16 %v43
  %v131 = vunpack.c.l.b16 %v44
  %v132 = vunpack.c.l.b16 %v45
  %v133 = vunpack.c.l.b16 %v46
  %v134 = vpack.c.b16 %v119, %v118
  %v135 = vpack.c.b16 %v121, %v120
  %v136 = vpack.c.b16 %v123, %v122
  %v137 = vpack.c.b16 %v125, %v124
  %v138 = vpack.c.b16 %v127, %v126
  %v139 = vpack.c.b16 %v129, %v128
  %v140 = vpack.c.b16 %v131, %v130
  %v141 = vpack.c.b16 %v133, %v132
  %150 = vmatprep.subr.bf16.mxu0 0
  %151 = vmatpush1.bf16.msra.mxu0 %v134
  %152 = vmatprep.subr.bf16.mxu0 0
  %153 = vmatpush1.bf16.msra.mxu0 %v135
  %154 = vmatprep.subr.bf16.mxu0 0
  %155 = vmatpush1.bf16.msra.mxu0 %v136
  %156 = vmatprep.subr.bf16.mxu0 0
  %157 = vmatpush1.bf16.msra.mxu0 %v137
  %158 = vmatprep.subr.bf16.mxu0 0
  %159 = vmatpush1.bf16.msra.mxu0 %v138
  %160 = vmatprep.subr.bf16.mxu0 0
  %161 = vmatpush1.bf16.msra.mxu0 %v139
  %162 = vmatprep.subr.bf16.mxu0 0
  %163 = vmatpush1.bf16.msra.mxu0 %v140
  %164 = vmatprep.subr.bf16.mxu0 0
  %165 = vmatpush1.bf16.msra.mxu0 %v141
  %166 = vmatprep.subr.bf16.mxu0 0
  %167 = vmatpush1.bf16.msra.mxu0 0
  %168 = vmatprep.subr.bf16.mxu0 0
  %169 = vmatpush1.bf16.msra.mxu0 0
  %170 = vmatprep.subr.bf16.mxu0 0
  %171 = vmatpush1.bf16.msra.mxu0 0
  %172 = vmatprep.subr.bf16.mxu0 0
  %173 = vmatpush1.bf16.msra.mxu0 0
  %174 = vmatprep.subr.bf16.mxu0 0
  %175 = vmatpush1.bf16.msra.mxu0 0
  %176 = vmatprep.subr.bf16.mxu0 0
  %177 = vmatpush1.bf16.msra.mxu0 0
  %178 = vmatprep.subr.bf16.mxu0 0
  %179 = vmatpush1.bf16.msra.mxu0 0
  %180 = vmatprep.subr.bf16.mxu0 0
  %181 = vmatpush1.bf16.msra.mxu0 0
  %182 = vmatprep.mubr.bf16.mxu0 0
  %183 = vmatmul.mubr.bf16.gmra.mrb[0].mxu0 %v86
  %v184 = vpop.f32.mrb[0].mxu0
  %v185 = vadd.f32 %v52, %v184
  %v186 = vpop.f32.mrb[0].mxu0
  %v187 = vpop.f32.mrb[0].mxu0
  %v188 = vadd.f32 %v52, %v187
  %v189 = vpop.f32.mrb[0].mxu0
  %190 = vmatprep.mubr.bf16.mxu0 0
  %191 = vmatmul.mubr.bf16.gmra.mrb[0].mxu0 %v87
  %v192 = vpop.f32.mrb[0].mxu0
  %v193 = vadd.f32 %v52, %v192
  %v194 = vpop.f32.mrb[0].mxu0
  %v195 = vpop.f32.mrb[0].mxu0
  %v196 = vadd.f32 %v52, %v195
  %v197 = vpop.f32.mrb[0].mxu0
  %198 = vmatprep.mubr.bf16.mxu0 0
  %199 = vmatmul.mubr.bf16.gmra.mrb[0].mxu0 %v88
  %v200 = vpop.f32.mrb[0].mxu0
  %v201 = vadd.f32 %v52, %v200
  %v202 = vpop.f32.mrb[0].mxu0
  %v203 = vpop.f32.mrb[0].mxu0
  %v204 = vadd.f32 %v52, %v203
  %v205 = vpop.f32.mrb[0].mxu0
  %206 = vmatprep.mubr.bf16.mxu0 0
  %207 = vmatmul.mubr.bf16.gmra.mrb[0].mxu0 %v89
  %v208 = vpop.f32.mrb[0].mxu0
  %v209 = vadd.f32 %v52, %v208
  %v210 = vpop.f32.mrb[0].mxu0
  %v211 = vpop.f32.mrb[0].mxu0
  %v212 = vadd.f32 %v52, %v211
  %v213 = vpop.f32.mrb[0].mxu0
  %214 = vmatprep.mubr.bf16.mxu0 0
  %215 = vmatmul.mubr.bf16.gmra.mrb[0].mxu0 %v90
  %v216 = vpop.f32.mrb[0].mxu0
  %v217 = vadd.f32 %v52, %v216
  %v218 = vpop.f32.mrb[0].mxu0
  %v219 = vpop.f32.mrb[0].mxu0
  %v220 = vadd.f32 %v52, %v219
  %v221 = vpop.f32.mrb[0].mxu0
  %222 = vmatprep.mubr.bf16.mxu0 0
  %223 = vmatmul.mubr.bf16.gmra.mrb[0].mxu0 %v91
  %v224 = vpop.f32.mrb[0].mxu0
  %v225 = vadd.f32 %v52, %v224
  %v226 = vpop.f32.mrb[0].mxu0
  %v227 = vpop.f32.mrb[0].mxu0
  %v228 = vadd.f32 %v52, %v227
  %v229 = vpop.f32.mrb[0].mxu0
  %230 = vmatprep.mubr.bf16.mxu0 0
  %231 = vmatmul.mubr.bf16.gmra.mrb[0].mxu0 %v92
  %v232 = vpop.f32.mrb[0].mxu0
  %v233 = vadd.f32 %v52, %v232
  %v234 = vpop.f32.mrb[0].mxu0
  %v235 = vpop.f32.mrb[0].mxu0
  %v236 = vadd.f32 %v52, %v235
  %v237 = vpop.f32.mrb[0].mxu0
  %238 = vmatprep.mubr.bf16.mxu0 0
  %239 = vmatmul.mubr.bf16.gmra.mrb[0].mxu0 %v93
  %v240 = vpop.f32.mrb[0].mxu0
  %v241 = vadd.f32 %v52, %v240
  %v242 = vpop.f32.mrb[0].mxu0
  %v243 = vpop.f32.mrb[0].mxu0
  %v244 = vadd.f32 %v52, %v243
  %v245 = vpop.f32.mrb[0].mxu0
  %246 = vdwg.mxu0
  %v247 = vmax.f32 %v185, 0.0
  %v248 = vmax.f32 %v188, 0.0
  %v249 = vmax.f32 %v193, 0.0
  %v250 = vmax.f32 %v196, 0.0
  %v251 = vmax.f32 %v201, 0.0
  %v252 = vmax.f32 %v204, 0.0
  %v253 = vmax.f32 %v209, 0.0
  %v254 = vmax.f32 %v212, 0.0
  %v255 = vmax.f32 %v217, 0.0
  %v256 = vmax.f32 %v220, 0.0
  %v257 = vmax.f32 %v225, 0.0
  %v258 = vmax.f32 %v228, 0.0
  %v259 = vmax.f32 %v233, 0.0
  %v260 = vmax.f32 %v236, 0.0
  %v261 = vmax.f32 %v241, 0.0
  %v262 = vmax.f32 %v244, 0.0
  %vm263 = vcmask 261120
  %264 = vst.msk [vmem:[%s3] sm:$0xff] %vm263, %v247
  %265 = vst.msk [vmem:[%s3 + $0x8] sm:$0xff] %vm263, %v248
  %266 = vst.msk [vmem:[%s3 + $0x10] sm:$0xff] %vm263, %v249
  %267 = vst.msk [vmem:[%s3 + $0x18] sm:$0xff] %vm263, %v250
  %268 = vst.msk [vmem:[%s3 + $0x20] sm:$0xff] %vm263, %v251
  %269 = vst.msk [vmem:[%s3 + $0x28] sm:$0xff] %vm263, %v252
  %270 = vst.msk [vmem:[%s3 + $0x30] sm:$0xff] %vm263, %v253
  %271 = vst.msk [vmem:[%s3 + $0x38] sm:$0xff] %vm263, %v254
  %272 = vst.msk [vmem:[%s3 + $0x40] sm:$0xff] %vm263, %v255
  %273 = vst.msk [vmem:[%s3 + $0x48] sm:$0xff] %vm263, %v256
  %274 = vst.msk [vmem:[%s3 + $0x50] sm:$0xff] %vm263, %v257
  %275 = vst.msk [vmem:[%s3 + $0x58] sm:$0xff] %vm263, %v258
  %276 = vst.msk [vmem:[%s3 + $0x60] sm:$0xff] %vm263, %v259
  %277 = vst.msk [vmem:[%s3 + $0x68] sm:$0xff] %vm263, %v260
  %278 = vst.msk [vmem:[%s3 + $0x70] sm:$0xff] %vm263, %v261
  %279 = vst.msk [vmem:[%s3 + $0x78] sm:$0xff] %vm263, %v262
  // Predicated region
  $region14: #{tpu_custom_call.1} parent=0 // pred_check
    _
  $region15: #{tpu_custom_call.1} parent=0 // pred_check_branch
    %281 = sbr.rel (0) target = $region17
  $region16: #{tpu_custom_call.1} parent=0 // pred_region
    _
  $region17: #{tpu_custom_call.1} parent=0 // pred_fallthru
    _
  // Predicated region
  $region18: #{tpu_custom_call.1} parent=0 // pred_check
    _
  $region19: #{tpu_custom_call.1} parent=0 // pred_check_branch
    %283 = sbr.rel (0) target = $region21
  $region20: #{tpu_custom_call.1} parent=0 // pred_region
    _
  $region21: #{tpu_custom_call.1} parent=0 // pred_fallthru
    _

</llo_original>
